<compile_context>
chip_gen: v6e
topology: v6e:2x2x1
jax: 0.10.0
libtpu: 0.0.40
codegen_flags: <defaults>
</compile_context>

<pallas_src>
import functools

import jax
import jax.numpy as jnp
from jax.experimental import pallas as pl
from jax.experimental.pallas import tpu as pltpu

LANE = 128      # feature dims padded to multiples of 128 (lane axis)
SUBLANE = 8     # batch padding granularity (sublane axis, f32)
MIB = 1024 * 1024


def _round_up(x, m):
    return ((x + m - 1) // m) * m


# ----------------------------- Pallas kernel --------------------------------
def _fused_mlp_kernel(x_ref, w_ref, b_ref, o_ref, *, num_layers, k_in, compute_dtype):
    # x_ref: [TB, Kp]  f32 (native input width, no 128-lane HBM padding)
    # w_ref: [L, P, P] compute_dtype (pre-transposed [in, out], zero padded)
    # b_ref: [L, P]    f32
    # o_ref: [TB, P]   f32 (lane-dense 128-wide stores)
    h = x_ref[...].astype(compute_dtype)
    for l in range(num_layers):
        # Layer 0 contracts only over the real input width (static sublane slice).
        w_l = w_ref[0, :k_in, :] if l == 0 else w_ref[l]
        h = jnp.dot(h, w_l, preferred_element_type=jnp.float32) + b_ref[l]
        if l < num_layers - 1:
            h = jnp.maximum(h, 0.0).astype(compute_dtype)
    o_ref[...] = h.astype(o_ref.dtype)


# --------------------------- Parameter init ----------------------------------
def init_feedforward_params(key, input_size, layers_sizes):
    """kaiming_uniform_ (PyTorch default a=0 -> bound sqrt(6/fan_in)) + zero bias.

    Weights kept in PyTorch layout [out, in]; transposed once in make_feedforward.
    """
    params = []
    fan_in = input_size
    for size in layers_sizes:
        key, wkey = jax.random.split(key)
        bound = jnp.sqrt(6.0 / fan_in)
        w = jax.random.uniform(
            wkey, (size, fan_in), dtype=jnp.float32, minval=-bound, maxval=bound
        )
        b = jnp.zeros((size,), dtype=jnp.float32)
        params.append((w, b))
        fan_in = size
    return params


# ------------------------ Fused forward construction --------------------------
def make_feedforward(params, input_size, *, batch_tile=256, compute_dtype=jnp.bfloat16):
    """Pack/pad params once; return a jitted forward(x) using one fused kernel."""
    num_layers = len(params)
    out_size = params[-1][0].shape[0]
    cdtype = jnp.dtype(compute_dtype)

    # Common padded feature width P (all dims here pad up to 128).
    # NOTE: uniform square padding is fine while every width pads to <=128;
    # pad per-layer (P_in, P_out) instead if layer widths ever diverge a lot.
    dims = [input_size] + [w.shape[0] for (w, _) in params]
    P = max(_round_up(d, LANE) for d in dims)

    # Input width rounded only to sublane / packing granularity (8 f32, 16 bf16).
    k_align = SUBLANE * max(1, 4 // cdtype.itemsize)
    Kp = _round_up(input_size, k_align)

    # Pre-transpose to [in, out], zero-pad to [P, P], stack -> [L, P, P].
    w_slabs, b_slabs = [], []
    for (w, b) in params:
        n_out, n_in = w.shape
        w_t = jnp.zeros((P, P), dtype=cdtype)
        w_t = w_t.at[:n_in, :n_out].set(jnp.transpose(w).astype(cdtype))
        b_p = jnp.zeros((P,), dtype=jnp.float32).at[:n_out].set(b.astype(jnp.float32))
        w_slabs.append(w_t)
        b_slabs.append(b_p)
    w_stack = jnp.stack(w_slabs)   # [L, P, P] compute_dtype
    b_stack = jnp.stack(b_slabs)   # [L, P]    f32

    kernel = functools.partial(
        _fused_mlp_kernel, num_layers=num_layers, k_in=Kp, compute_dtype=cdtype
    )

    w_bytes = num_layers * P * P * cdtype.itemsize
    b_bytes = num_layers * P * 4

    @jax.jit
    def forward(x):
        B, K = x.shape
        assert K == input_size
        x = x.astype(jnp.float32)

        # --- batch tile selection: big tiles feed the MXU rows; keep >=2 grid
        # steps (for v7x's two TensorCores) only when each block stays >=128.
        B_pad = _round_up(max(B, SUBLANE), SUBLANE)
        if B_pad >= 2 * batch_tile:
            tb = batch_tile
            B_pad = _round_up(B, tb)
        elif B_pad >= 2 * LANE and (B_pad // 2) % SUBLANE == 0:
            tb = B_pad // 2
        else:
            tb = B_pad
        grid = (B_pad // tb,)

        # Only row-pad (and 8/16-align the feature dim); no 4x HBM inflation.
        if B_pad != B or Kp != K:
            x_pad = jnp.zeros((B_pad, Kp), jnp.float32).at[:B, :K].set(x)
        else:
            x_pad = x

        # --- VMEM budget guard (all layers resident + default double-buffering).
        est = 2 * (w_bytes + b_bytes) + 4 * tb * Kp * 4 + 4 * tb * P * 4
        if est > 56 * MIB:
            raise ValueError(
                f"Fused all-layers-resident MLP needs ~{est // MIB} MiB VMEM; "
                "tile over layers / K instead (v7x has 64 MiB VMEM)."
            )
        vmem_limit = min(2 * est, 64 * MIB) if est > 24 * MIB else None

        flops = 2 * B_pad * (Kp * P + (num_layers - 1) * P * P)
        bytes_accessed = B_pad * Kp * 4 + w_bytes + b_bytes + B_pad * P * 4

        out_pad = pl.pallas_call(
            kernel,
            out_shape=jax.ShapeDtypeStruct((B_pad, P), jnp.float32),
            grid=grid,
            in_specs=[
                pl.BlockSpec((tb, Kp), lambda i: (i, 0)),                 # x tile
                # Weight/bias blocks are grid-invariant; pl.Buffered(1) would
                # drop their second pipeline buffer (only matters for large P).
                pl.BlockSpec((num_layers, P, P), lambda i: (0, 0, 0)),    # all weights
                pl.BlockSpec((num_layers, P), lambda i: (0, 0)),          # all biases
            ],
            out_specs=pl.BlockSpec((tb, P), lambda i: (i, 0)),
            compiler_params=pltpu.CompilerParams(
                dimension_semantics=("parallel",),   # shard batch tiles across TCs
                vmem_limit_bytes=vmem_limit,
            ),
            cost_estimate=pl.CostEstimate(
                flops=flops, transcendentals=0, bytes_accessed=bytes_accessed
            ),
        )(x_pad, w_stack, b_stack)
        return out_pad[:B, :out_size]

    return forward


# ------------------------------ Reference -------------------------------------
def feedforward_reference(x, params):
    n_layers = len(params)
    for i, (w, b) in enumerate(params):
        x = x @ w.T + b
        if i < n_layers - 1:
            x = jnp.maximum(x, 0.0)
    return x


# ---------------------------------- Main --------------------------------------
if __name__ == "__main__":
    key = jax.random.PRNGKey(0)
    key, xkey = jax.random.split(key)

    # Small shapes consistent with the module: Feedforward(input_size=32, [64, 32, 8])
    batch = 16
    input_size = 32
    layers_sizes = [64, 32, 8]

    x = jax.random.normal(xkey, (batch, input_size), dtype=jnp.float32)
    params = init_feedforward_params(key, input_size, layers_sizes)

    ref = feedforward_reference(x, params)

    # f32 compute path: bit-for-bit structural check against the reference.
    forward_f32 = make_feedforward(params, input_size, compute_dtype=jnp.float32)
    out_f32 = jax.block_until_ready(forward_f32(x))
    assert out_f32.shape == (batch, layers_sizes[-1])
    assert jnp.allclose(out_f32, ref, atol=1e-5, rtol=1e-5)

    # bf16 MXU fast path (f32 accumulation): loosened tolerance.
    forward = make_feedforward(params, input_size)
    out = jax.block_until_ready(forward(x))
    assert out.shape == (batch, layers_sizes[-1])
    assert jnp.allclose(out, ref, atol=1e-1, rtol=2e-2)

    print("KERNEL_OK")
</pallas_src>

<mosaic_0001>
module attributes {stable_mosaic.version = 11 : i64} {
  func.func @_fused_mlp_kernel(%arg0: i32, %arg1: memref<16x32xf32, #tpu.memory_space<vmem>>, %arg2: memref<3x128x128xf32, #tpu.memory_space<vmem>>, %arg3: memref<3x128xf32, #tpu.memory_space<vmem>>, %arg4: memref<16x128xf32, #tpu.memory_space<vmem>>) attributes {dimension_semantics = [#tpu.dimension_semantics<parallel>], iteration_bounds = array<i64: 1>, scalar_prefetch = 0 : i64, scratch_operands = 0 : i64, tpu.core_type = #tpu.core_type<tc>, window_params = [{transform_indices = @transform_0, window_bounds = array<i64: 16, 32>}, {pipeline_mode = #tpu.pipeline_mode<synchronous>, transform_indices = @transform_1, window_bounds = array<i64: 3, 128, 128>}, {pipeline_mode = #tpu.pipeline_mode<synchronous>, transform_indices = @transform_2, window_bounds = array<i64: 3, 128>}, {transform_indices = @transform_3, window_bounds = array<i64: 16, 128>}]} {
    %c0 = arith.constant 0 : index
    %c0_0 = arith.constant 0 : index
    %0 = vector.load %arg1[%c0, %c0_0] : memref<16x32xf32, #tpu.memory_space<vmem>>, vector<16x32xf32>
    %c0_1 = arith.constant 0 : index
    %c0_2 = arith.constant 0 : index
    %c0_3 = arith.constant 0 : index
    %1 = vector.load %arg2[%c0_1, %c0_2, %c0_3] : memref<3x128x128xf32, #tpu.memory_space<vmem>>, vector<1x32x128xf32>
    %2 = vector.shape_cast %1 : vector<1x32x128xf32> to vector<32x128xf32>
    %cst = arith.constant dense<0.000000e+00> : vector<16x128xf32>
    %3 = tpu.matmul %0, %2, %cst {dimension_numbers = #tpu.dot_dimension_numbers<[1], [0], [0], [1], [0, 0, 1, 1], [], []>} : vector<16x32xf32>, vector<32x128xf32>, vector<16x128xf32> -> vector<16x128xf32>
    %c0_4 = arith.constant 0 : index
    %c0_5 = arith.constant 0 : index
    %4 = vector.load %arg3[%c0_4, %c0_5] : memref<3x128xf32, #tpu.memory_space<vmem>>, vector<1x128xf32>
    %5 = vector.shape_cast %4 : vector<1x128xf32> to vector<128xf32>
    %6 = vector.shape_cast %5 : vector<128xf32> to vector<1x128xf32>
    %7 = vector.broadcast %6 : vector<1x128xf32> to vector<16x128xf32>
    %8 = arith.addf %3, %7 : vector<16x128xf32>
    %cst_6 = arith.constant 0.000000e+00 : f32
    %9 = vector.broadcast %cst_6 : f32 to vector<16x128xf32>
    %10 = arith.maximumf %8, %9 : vector<16x128xf32>
    %c1 = arith.constant 1 : index
    %c0_7 = arith.constant 0 : index
    %c0_8 = arith.constant 0 : index
    %11 = vector.load %arg2[%c1, %c0_7, %c0_8] : memref<3x128x128xf32, #tpu.memory_space<vmem>>, vector<1x128x128xf32>
    %12 = vector.shape_cast %11 : vector<1x128x128xf32> to vector<128x128xf32>
    %cst_9 = arith.constant dense<0.000000e+00> : vector<16x128xf32>
    %13 = tpu.matmul %10, %12, %cst_9 {dimension_numbers = #tpu.dot_dimension_numbers<[1], [0], [0], [1], [0, 0, 1, 1], [], []>} : vector<16x128xf32>, vector<128x128xf32>, vector<16x128xf32> -> vector<16x128xf32>
    %c1_10 = arith.constant 1 : index
    %c0_11 = arith.constant 0 : index
    %14 = vector.load %arg3[%c1_10, %c0_11] : memref<3x128xf32, #tpu.memory_space<vmem>>, vector<1x128xf32>
    %15 = vector.shape_cast %14 : vector<1x128xf32> to vector<128xf32>
    %16 = vector.shape_cast %15 : vector<128xf32> to vector<1x128xf32>
    %17 = vector.broadcast %16 : vector<1x128xf32> to vector<16x128xf32>
    %18 = arith.addf %13, %17 : vector<16x128xf32>
    %cst_12 = arith.constant 0.000000e+00 : f32
    %19 = vector.broadcast %cst_12 : f32 to vector<16x128xf32>
    %20 = arith.maximumf %18, %19 : vector<16x128xf32>
    %c2 = arith.constant 2 : index
    %c0_13 = arith.constant 0 : index
    %c0_14 = arith.constant 0 : index
    %21 = vector.load %arg2[%c2, %c0_13, %c0_14] : memref<3x128x128xf32, #tpu.memory_space<vmem>>, vector<1x128x128xf32>
    %22 = vector.shape_cast %21 : vector<1x128x128xf32> to vector<128x128xf32>
    %cst_15 = arith.constant dense<0.000000e+00> : vector<16x128xf32>
    %23 = tpu.matmul %20, %22, %cst_15 {dimension_numbers = #tpu.dot_dimension_numbers<[1], [0], [0], [1], [0, 0, 1, 1], [], []>} : vector<16x128xf32>, vector<128x128xf32>, vector<16x128xf32> -> vector<16x128xf32>
    %c2_16 = arith.constant 2 : index
    %c0_17 = arith.constant 0 : index
    %24 = vector.load %arg3[%c2_16, %c0_17] : memref<3x128xf32, #tpu.memory_space<vmem>>, vector<1x128xf32>
    %25 = vector.shape_cast %24 : vector<1x128xf32> to vector<128xf32>
    %26 = vector.shape_cast %25 : vector<128xf32> to vector<1x128xf32>
    %27 = vector.broadcast %26 : vector<1x128xf32> to vector<16x128xf32>
    %28 = arith.addf %23, %27 : vector<16x128xf32>
    %c0_18 = arith.constant 0 : index
    %c0_19 = arith.constant 0 : index
    %29 = vector.load %arg4[%c0_18, %c0_19] : memref<16x128xf32, #tpu.memory_space<vmem>>, vector<16x128xf32>
    tpu.vector_store %arg4[%c0_18, %c0_19], %28 {strides = array<i32>} : memref<16x128xf32, #tpu.memory_space<vmem>>, vector<16x128xf32>,
    return
  }
  func.func @transform_0(%arg0: i32) -> (i32, i32) {
    %c0_i32 = arith.constant 0 : i32
    %c0_i32_0 = arith.constant 0 : i32
    return %arg0, %c0_i32 : i32, i32
  }
  func.func @transform_1(%arg0: i32) -> (i32, i32, i32) {
    %c0_i32 = arith.constant 0 : i32
    %c0_i32_0 = arith.constant 0 : i32
    %c0_i32_1 = arith.constant 0 : i32
    %c0_i32_2 = arith.constant 0 : i32
    return %c0_i32, %c0_i32_0, %c0_i32_1 : i32, i32, i32
  }
  func.func @transform_2(%arg0: i32) -> (i32, i32) {
    %c0_i32 = arith.constant 0 : i32
    %c0_i32_0 = arith.constant 0 : i32
    %c0_i32_1 = arith.constant 0 : i32
    return %c0_i32, %c0_i32_0 : i32, i32
  }
  func.func @transform_3(%arg0: i32) -> (i32, i32) {
    %c0_i32 = arith.constant 0 : i32
    %c0_i32_0 = arith.constant 0 : i32
    return %arg0, %c0_i32 : i32, i32
  }
}

</mosaic_0001>

<llo_original>
// kernel: forward.1
$region0: #{forward.1}
  #allocation0 [shape = 'u32[]', space=smem, size = 0x4, offset = 0x4, fixed_abs, tag = 'smem constant byte address 0x4 - core index']
  #allocation1 [shape = 'u32[144,128]{1,0:T(1,128)}', space=vmem, size = 0x12000, scoped, tag = 'internal scratch']
  %s0 = inlined_call_operand.hbm [shape: f32[16,32], index: 0, kind: input, shape index: {}]
  %s1 = inlined_call_operand.hbm [shape: f32[3,128,128], index: 1, kind: input, shape index: {}]
  %s2 = inlined_call_operand.vmem [shape: f32[3,128], index: 2, kind: input, shape index: {}]
  %s3 = inlined_call_operand.vmem [shape: f32[16,128], index: 3, kind: output, shape index: {}]
  %s4 = sld [smem:[#allocation0]]
  $region30: #{forward.1} parent=0
    _
  %s6 = ssub.s32 1, %s4
  %s7 = scalar_select 0, %s6, %s4
  $region1: #{forward.1} parent=0
    #allocation2 [shape = 'u8[8192]{0}', space=vmem, size = 0x2000, scoped, tag = 'input window, operand 0, single buffered']
    #allocation3 [shape = 's32[1]{0}', space=sflag, size = 0x4, scoped, tag = 'scoped memory for forward.1']
    #allocation4 [shape = 'u8[196608]{0}', space=vmem, size = 0x30000, scoped, tag = 'input window, operand 1, single buffered']
    #allocation5 [shape = 's32[1]{0}', space=sflag, size = 0x4, scoped, tag = 'scoped memory for forward.1']
    %8 = vsyncpa [#allocation3], 0
    %9 = vsyncpa [#allocation5], 0
    // Predicated region
    $region2: #{forward.1} parent=1 // pred_check
      _
    $region3: #{forward.1} parent=1 // pred_check_branch
      %11 = sbr.rel (0) target = $region5
    $region4: #{forward.1} parent=1 // pred_region
      %s13 = ssub.s32 256, 256
      %14 = vsyncadd [#allocation3], %s13
      %s15 = sshll.u32 [#allocation2], 4
      %s16 = int_to_ptr.vmem [resolvable:$true] %s15
      %21 = dma.hbm_to_vmem [thread:$0]  %s0, 256, %s16, [#allocation3], 128, 128, 8
    $region5: #{forward.1} parent=1 // pred_fallthru
      _
    // Predicated region
    $region6: #{forward.1} parent=1 // pred_check
      _
    $region7: #{forward.1} parent=1 // pred_check_branch
      %23 = sbr.rel (0) target = $region9
    $region8: #{forward.1} parent=1 // pred_region
      %s25 = ssub.s32 6144, 6144
      %26 = vsyncadd [#allocation5], %s25
      %s27 = sshll.u32 [#allocation4], 4
      %s28 = int_to_ptr.vmem [resolvable:$true] %s27
      %33 = dma.hbm_to_vmem [thread:$0]  %s1, 6144, %s28, [#allocation5], 128, 128, 8
    $region9: #{forward.1} parent=1 // pred_fallthru
      _
    // Predicated region
    $region10: #{forward.1} parent=1 // pred_check
      _
    $region11: #{forward.1} parent=1 // pred_check_branch
      %35 = sbr.rel (0) target = $region13
    $region12: #{forward.1} parent=1 // pred_region
      _
    $region13: #{forward.1} parent=1 // pred_fallthru
      _
    // Predicated region
    $region14: #{forward.1} parent=1 // pred_check
      _
    $region15: #{forward.1} parent=1 // pred_check_branch
      %37 = sbr.rel (0) target = $region17
    $region16: #{forward.1} parent=1 // pred_region
      %38 = dma.done [#allocation3], 256
    $region17: #{forward.1} parent=1 // pred_fallthru
      _
    // Predicated region
    $region18: #{forward.1} parent=1 // pred_check
      _
    $region19: #{forward.1} parent=1 // pred_check_branch
      %40 = sbr.rel (0) target = $region21
    $region20: #{forward.1} parent=1 // pred_region
      %41 = dma.done [#allocation5], 6144
    $region21: #{forward.1} parent=1 // pred_fallthru
      _
    %v42 = vld [vmem:[#allocation2] sm:$0xff]
    %v43 = vld [vmem:[#allocation2 + $0x8] sm:$0xff]
    %v44 = vld [vmem:[#allocation4] sm:$0xff]
    %v45 = vld [vmem:[#allocation4 + $0x8] sm:$0xff]
    %v46 = vld [vmem:[#allocation4 + $0x10] sm:$0xff]
    %v47 = vld [vmem:[#allocation4 + $0x18] sm:$0xff]
    %v48 = vld [vmem:[%s2] sm:$0x1]
    %v49 = vlaneseq
    %v50 = vshrl.u32 %v49, 7
    %v51 = vsub.s32 0, %v50
    %v52 = vrot.slane %v48, %v51
    %vm53 = vcmask 261120
    %v55 = vsel %vm53, %v42, 0
    %v58 = vsel %vm53, %v43, 0
    %60 = vmatprep.subr.mxu0 0.0
    %61 = vmatpush1.msra.mxu0 0.0
    %62 = vmatprep.subr.mxu0 0.0
    %63 = vmatpush1.msra.mxu0 0.0
    %64 = vmatprep.subr.mxu0 0.0
    %65 = vmatpush1.msra.mxu0 0.0
    %66 = vmatprep.subr.mxu0 0.0
    %67 = vmatpush1.msra.mxu0 0.0
    %68 = vmatprep.subr.mxu0 0.0
    %69 = vmatpush1.msra.mxu0 0.0
    %70 = vmatprep.subr.mxu0 0.0
    %71 = vmatpush1.msra.mxu0 0.0
    %72 = vmatprep.subr.mxu0 0.0
    %73 = vmatpush1.msra.mxu0 0.0
    %74 = vmatprep.subr.mxu0 0.0
    %75 = vmatpush1.msra.mxu0 0.0
    %76 = vmatprep.subr.mxu0 0.0
    %77 = vmatpush1.msra.mxu0 0.0
    %78 = vmatprep.subr.mxu0 0.0
    %79 = vmatpush1.msra.mxu0 0.0
    %80 = vmatprep.subr.mxu0 0.0
    %81 = vmatpush1.msra.mxu0 0.0
    %82 = vmatprep.subr.mxu0 0.0
    %83 = vmatpush1.msra.mxu0 0.0
    %84 = vmatprep.subr.mxu0 0.0
    %85 = vmatpush1.msra.mxu0 %v47
    %86 = vmatprep.subr.mxu0 0.0
    %87 = vmatpush1.msra.mxu0 %v46
    %88 = vmatprep.subr.mxu0 0.0
    %89 = vmatpush1.msra.mxu0 %v45
    %90 = vmatprep.subr.mxu0 0.0
    %91 = vmatpush1.msra.mxu0 %v44
    %92 = vmatprep.subr.mxu0 0.0
    %93 = vmatpush2.msra.mxu0 0.0
    %94 = vmatprep.subr.mxu0 0.0
    %95 = vmatpush2.msra.mxu0 0.0
    %96 = vmatprep.subr.mxu0 0.0
    %97 = vmatpush2.msra.mxu0 0.0
    %98 = vmatprep.subr.mxu0 0.0
    %99 = vmatpush2.msra.mxu0 0.0
    %100 = vmatprep.subr.mxu0 0.0
    %101 = vmatpush2.msra.mxu0 0.0
    %102 = vmatprep.subr.mxu0 0.0
    %103 = vmatpush2.msra.mxu0 0.0
    %104 = vmatprep.subr.mxu0 0.0
    %105 = vmatpush2.msra.mxu0 0.0
    %106 = vmatprep.subr.mxu0 0.0
    %107 = vmatpush2.msra.mxu0 0.0
    %108 = vmatprep.subr.mxu0 0.0
    %109 = vmatpush2.msra.mxu0 0.0
    %110 = vmatprep.subr.mxu0 0.0
    %111 = vmatpush2.msra.mxu0 0.0
    %112 = vmatprep.subr.mxu0 0.0
    %113 = vmatpush2.msra.mxu0 0.0
    %114 = vmatprep.subr.mxu0 0.0
    %115 = vmatpush2.msra.mxu0 0.0
    %116 = vmatprep.subr.mxu0 0.0
    %117 = vmatpush2.msra.mxu0 0.0
    %118 = vmatprep.subr.mxu0 0.0
    %119 = vmatpush2.msra.mxu0 0.0
    %120 = vmatprep.subr.mxu0 0.0
    %121 = vmatpush2.msra.mxu0 0.0
    %122 = vmatprep.subr.mxu0 0.0
    %123 = vmatpush2.msra.mxu0 0.0
    %124 = vmatprep.mubr.f32.mxu0 0.0
    %125 = vmatmul.mubr.f32.gmra.mxu0 %v55
    %v126 = vpop.f32.mrf.mxu0
    %v127 = vadd.f32 %v52, %v126
    %v128 = vpop.f32.mrf.mxu0
    %129 = vmatprep.mubr.f32.mxu0 0.0
    %130 = vmatmul.mubr.f32.gmra.mxu0 %v58
    %v131 = vpop.f32.mrf.mxu0
    %v132 = vadd.f32 %v52, %v131
    %v133 = vpop.f32.mrf.mxu0
    %134 = vdwg.mxu0
    %v135 = vmax.f32 %v127, 0.0
    %v136 = vmax.f32 %v132, 0.0
    %s137 = scalar_lea.vmem [#allocation4], 128
    %v138 = vld [vmem:[%s137] sm:$0xff]
    %v139 = vld [vmem:[%s137 + $0x8] sm:$0xff]
    %v140 = vld [vmem:[%s137 + $0x10] sm:$0xff]
    %v141 = vld [vmem:[%s137 + $0x18] sm:$0xff]
    %v142 = vld [vmem:[%s137 + $0x20] sm:$0xff]
    %v143 = vld [vmem:[%s137 + $0x28] sm:$0xff]
    %v144 = vld [vmem:[%s137 + $0x30] sm:$0xff]
    %v145 = vld [vmem:[%s137 + $0x38] sm:$0xff]
    %v146 = vld [vmem:[%s137 + $0x40] sm:$0xff]
    %v147 = vld [vmem:[%s137 + $0x48] sm:$0xff]
    %v148 = vld [vmem:[%s137 + $0x50] sm:$0xff]
    %v149 = vld [vmem:[%s137 + $0x58] sm:$0xff]
    %v150 = vld [vmem:[%s137 + $0x60] sm:$0xff]
    %v151 = vld [vmem:[%s137 + $0x68] sm:$0xff]
    %v152 = vld [vmem:[%s137 + $0x70] sm:$0xff]
    %v153 = vld [vmem:[%s137 + $0x78] sm:$0xff]
    %v154 = vld [vmem:[%s2 + $0x1] sm:$0x1]
    %v155 = vlaneseq
    %v156 = vshrl.u32 %v155, 7
    %v157 = vsub.s32 0, %v156
    %v158 = vrot.slane %v154, %v157
    %159 = vmatprep.subr.mxu0 0.0
    %160 = vmatpush1.msra.mxu0 %v153
    %161 = vmatprep.subr.mxu0 0.0
    %162 = vmatpush1.msra.mxu0 %v152
    %163 = vmatprep.subr.mxu0 0.0
    %164 = vmatpush1.msra.mxu0 %v151
    %165 = vmatprep.subr.mxu0 0.0
    %166 = vmatpush1.msra.mxu0 %v150
    %167 = vmatprep.subr.mxu0 0.0
    %168 = vmatpush1.msra.mxu0 %v149
    %169 = vmatprep.subr.mxu0 0.0
    %170 = vmatpush1.msra.mxu0 %v148
    %171 = vmatprep.subr.mxu0 0.0
    %172 = vmatpush1.msra.mxu0 %v147
    %173 = vmatprep.subr.mxu0 0.0
    %174 = vmatpush1.msra.mxu0 %v146
    %175 = vmatprep.subr.mxu0 0.0
    %176 = vmatpush1.msra.mxu0 %v145
    %177 = vmatprep.subr.mxu0 0.0
    %178 = vmatpush1.msra.mxu0 %v144
    %179 = vmatprep.subr.mxu0 0.0
    %180 = vmatpush1.msra.mxu0 %v143
    %181 = vmatprep.subr.mxu0 0.0
    %182 = vmatpush1.msra.mxu0 %v142
    %183 = vmatprep.subr.mxu0 0.0
    %184 = vmatpush1.msra.mxu0 %v141
    %185 = vmatprep.subr.mxu0 0.0
    %186 = vmatpush1.msra.mxu0 %v140
    %187 = vmatprep.subr.mxu0 0.0
    %188 = vmatpush1.msra.mxu0 %v139
    %189 = vmatprep.subr.mxu0 0.0
    %190 = vmatpush1.msra.mxu0 %v138
    %191 = vmatprep.subr.mxu0 0.0
    %192 = vmatpush2.msra.mxu0 0.0
    %193 = vmatprep.subr.mxu0 0.0
    %194 = vmatpush2.msra.mxu0 0.0
    %195 = vmatprep.subr.mxu0 0.0
    %196 = vmatpush2.msra.mxu0 0.0
    %197 = vmatprep.subr.mxu0 0.0
    %198 = vmatpush2.msra.mxu0 0.0
    %199 = vmatprep.subr.mxu0 0.0
    %200 = vmatpush2.msra.mxu0 0.0
    %201 = vmatprep.subr.mxu0 0.0
    %202 = vmatpush2.msra.mxu0 0.0
    %203 = vmatprep.subr.mxu0 0.0
    %204 = vmatpush2.msra.mxu0 0.0
    %205 = vmatprep.subr.mxu0 0.0
    %206 = vmatpush2.msra.mxu0 0.0
    %207 = vmatprep.subr.mxu0 0.0
    %208 = vmatpush2.msra.mxu0 0.0
    %209 = vmatprep.subr.mxu0 0.0
    %210 = vmatpush2.msra.mxu0 0.0
    %211 = vmatprep.subr.mxu0 0.0
    %212 = vmatpush2.msra.mxu0 0.0
    %213 = vmatprep.subr.mxu0 0.0
    %214 = vmatpush2.msra.mxu0 0.0
    %215 = vmatprep.subr.mxu0 0.0
    %216 = vmatpush2.msra.mxu0 0.0
    %217 = vmatprep.subr.mxu0 0.0
    %218 = vmatpush2.msra.mxu0 0.0
    %219 = vmatprep.subr.mxu0 0.0
    %220 = vmatpush2.msra.mxu0 0.0
    %221 = vmatprep.subr.mxu0 0.0
    %222 = vmatpush2.msra.mxu0 0.0
    %223 = vmatprep.mubr.f32.mxu0 0.0
    %224 = vmatmul.mubr.f32.gmra.mxu0 %v135
    %v225 = vpop.f32.mrf.mxu0
    %v226 = vadd.f32 %v158, %v225
    %v227 = vpop.f32.mrf.mxu0
    %228 = vmatprep.mubr.f32.mxu0 0.0
    %229 = vmatmul.mubr.f32.gmra.mxu0 %v136
    %v230 = vpop.f32.mrf.mxu0
    %v231 = vadd.f32 %v158, %v230
    %v232 = vpop.f32.mrf.mxu0
    %233 = vdwg.mxu0
    %v234 = vmax.f32 %v226, 0.0
    %v235 = vmax.f32 %v231, 0.0
    %s236 = scalar_lea.vmem [#allocation4], 256
    %v237 = vld [vmem:[%s236] sm:$0xff]
    %v238 = vld [vmem:[%s236 + $0x8] sm:$0xff]
    %v239 = vld [vmem:[%s236 + $0x10] sm:$0xff]
    %v240 = vld [vmem:[%s236 + $0x18] sm:$0xff]
    %v241 = vld [vmem:[%s236 + $0x20] sm:$0xff]
    %v242 = vld [vmem:[%s236 + $0x28] sm:$0xff]
    %v243 = vld [vmem:[%s236 + $0x30] sm:$0xff]
    %v244 = vld [vmem:[%s236 + $0x38] sm:$0xff]
    %v245 = vld [vmem:[%s236 + $0x40] sm:$0xff]
    %v246 = vld [vmem:[%s236 + $0x48] sm:$0xff]
    %v247 = vld [vmem:[%s236 + $0x50] sm:$0xff]
    %v248 = vld [vmem:[%s236 + $0x58] sm:$0xff]
    %v249 = vld [vmem:[%s236 + $0x60] sm:$0xff]
    %v250 = vld [vmem:[%s236 + $0x68] sm:$0xff]
    %v251 = vld [vmem:[%s236 + $0x70] sm:$0xff]
    %v252 = vld [vmem:[%s236 + $0x78] sm:$0xff]
    %v253 = vld [vmem:[%s2 + $0x2] sm:$0x1]
    %v254 = vlaneseq
    %v255 = vshrl.u32 %v254, 7
    %v256 = vsub.s32 0, %v255
    %v257 = vrot.slane %v253, %v256
    %258 = vmatprep.subr.mxu0 0.0
    %259 = vmatpush1.msra.mxu0 %v252
    %260 = vmatprep.subr.mxu0 0.0
    %261 = vmatpush1.msra.mxu0 %v251
    %262 = vmatprep.subr.mxu0 0.0
    %263 = vmatpush1.msra.mxu0 %v250
    %264 = vmatprep.subr.mxu0 0.0
    %265 = vmatpush1.msra.mxu0 %v249
    %266 = vmatprep.subr.mxu0 0.0
    %267 = vmatpush1.msra.mxu0 %v248
    %268 = vmatprep.subr.mxu0 0.0
    %269 = vmatpush1.msra.mxu0 %v247
    %270 = vmatprep.subr.mxu0 0.0
    %271 = vmatpush1.msra.mxu0 %v246
    %272 = vmatprep.subr.mxu0 0.0
    %273 = vmatpush1.msra.mxu0 %v245
    %274 = vmatprep.subr.mxu0 0.0
    %275 = vmatpush1.msra.mxu0 %v244
    %276 = vmatprep.subr.mxu0 0.0
    %277 = vmatpush1.msra.mxu0 %v243
    %278 = vmatprep.subr.mxu0 0.0
    %279 = vmatpush1.msra.mxu0 %v242
    %280 = vmatprep.subr.mxu0 0.0
    %281 = vmatpush1.msra.mxu0 %v241
    %282 = vmatprep.subr.mxu0 0.0
    %283 = vmatpush1.msra.mxu0 %v240
    %284 = vmatprep.subr.mxu0 0.0
    %285 = vmatpush1.msra.mxu0 %v239
    %286 = vmatprep.subr.mxu0 0.0
    %287 = vmatpush1.msra.mxu0 %v238
    %288 = vmatprep.subr.mxu0 0.0
    %289 = vmatpush1.msra.mxu0 %v237
    %290 = vmatprep.subr.mxu0 0.0
    %291 = vmatpush2.msra.mxu0 0.0
    %292 = vmatprep.subr.mxu0 0.0
    %293 = vmatpush2.msra.mxu0 0.0
    %294 = vmatprep.subr.mxu0 0.0
    %295 = vmatpush2.msra.mxu0 0.0
    %296 = vmatprep.subr.mxu0 0.0
    %297 = vmatpush2.msra.mxu0 0.0
    %298 = vmatprep.subr.mxu0 0.0
    %299 = vmatpush2.msra.mxu0 0.0
    %300 = vmatprep.subr.mxu0 0.0
    %301 = vmatpush2.msra.mxu0 0.0
    %302 = vmatprep.subr.mxu0 0.0
    %303 = vmatpush2.msra.mxu0 0.0
    %304 = vmatprep.subr.mxu0 0.0
    %305 = vmatpush2.msra.mxu0 0.0
    %306 = vmatprep.subr.mxu0 0.0
    %307 = vmatpush2.msra.mxu0 0.0
    %308 = vmatprep.subr.mxu0 0.0
    %309 = vmatpush2.msra.mxu0 0.0
    %310 = vmatprep.subr.mxu0 0.0
    %311 = vmatpush2.msra.mxu0 0.0
    %312 = vmatprep.subr.mxu0 0.0
    %313 = vmatpush2.msra.mxu0 0.0
    %314 = vmatprep.subr.mxu0 0.0
    %315 = vmatpush2.msra.mxu0 0.0
    %316 = vmatprep.subr.mxu0 0.0
    %317 = vmatpush2.msra.mxu0 0.0
    %318 = vmatprep.subr.mxu0 0.0
    %319 = vmatpush2.msra.mxu0 0.0
    %320 = vmatprep.subr.mxu0 0.0
    %321 = vmatpush2.msra.mxu0 0.0
    %322 = vmatprep.mubr.f32.mxu0 0.0
    %323 = vmatmul.mubr.f32.gmra.mxu0 %v234
    %v324 = vpop.f32.mrf.mxu0
    %v325 = vadd.f32 %v257, %v324
    %v326 = vpop.f32.mrf.mxu0
    %327 = vmatprep.mubr.f32.mxu0 0.0
    %328 = vmatmul.mubr.f32.gmra.mxu0 %v235
    %v329 = vpop.f32.mrf.mxu0
    %v330 = vadd.f32 %v257, %v329
    %v331 = vpop.f32.mrf.mxu0
    %332 = vdwg.mxu0
    %333 = vst [vmem:[%s3] sm:$0xff] %v325
    %334 = vst [vmem:[%s3 + $0x8] sm:$0xff] %v330
    // Predicated region
    $region22: #{forward.1} parent=1 // pred_check
      _
    $region23: #{forward.1} parent=1 // pred_check_branch
      %336 = sbr.rel (0) target = $region25
    $region24: #{forward.1} parent=1 // pred_region
      _
    $region25: #{forward.1} parent=1 // pred_fallthru
      _
    // Predicated region
    $region26: #{forward.1} parent=1 // pred_check
      _
    $region27: #{forward.1} parent=1 // pred_check_branch
      %338 = sbr.rel (0) target = $region29
    $region28: #{forward.1} parent=1 // pred_region
      _
    $region29: #{forward.1} parent=1 // pred_fallthru
      _
    %339 = vsyncpa [#allocation3], 1
    %340 = vsyncpa [#allocation5], 1

</llo_original>
